<compile_context>
chip_gen: v6e
topology: v6e:2x2x1
jax: 0.10.0
libtpu: 0.0.40
codegen_flags: <defaults>
</compile_context>

<pallas_src>
import numpy as np
import jax
import jax.numpy as jnp
from jax.experimental import pallas as pl
from jax.experimental.pallas import tpu as pltpu


# ------------------------------ fused kernel -------------------------------

def _make_decoder_kernel(n_layers, hidden_dim, batch, vocab):
    """Fused kernel for static (n_layers, H, B, V)."""
    H = hidden_dim
    B = batch

    def kernel(*refs):
        # scalar prefetch ref first, then inputs, then outputs
        tok_ref = refs[0]                         # SMEM (T*B,) int32
        emb_ref, hid_ref, cell_ref = refs[1:4]    # (V,1,E), (L,B,H), (L,B,H)
        layer_refs = refs[4:4 + 3 * n_layers]     # (w_ih_t, w_hh_t, bias) * L
        fcw_ref = refs[4 + 3 * n_layers]          # (H, V_pad) bf16
        fcb_ref = refs[5 + 3 * n_layers]          # (1, V_pad) f32
        logits_ref, hout_ref, cout_ref = refs[6 + 3 * n_layers:]

        t = pl.program_id(0)

        # State lives in the VMEM-resident output blocks (constant out
        # index_map); initialize from the (aliased) inputs at step 0.
        @pl.when(t == 0)
        def _():
            hout_ref[...] = hid_ref[...]
            cout_ref[...] = cell_ref[...]

        # ---- embedding gather (token ids from SMEM, table VMEM-resident) ---
        rows = []
        for b in range(B):
            tok = jnp.clip(tok_ref[t * B + b], 0, vocab - 1)  # clamp like take
            rows.append(emb_ref[tok])                          # (1, E) f32
        x = jnp.concatenate(rows, axis=0)                      # (B, E) f32

        # ---- stacked LSTM single step (dropout = identity in eval mode) ----
        for layer in range(n_layers):
            w_ih_ref = layer_refs[3 * layer]                   # (D_in, 4H) bf16
            w_hh_ref = layer_refs[3 * layer + 1]               # (H, 4H)   bf16
            b_ref = layer_refs[3 * layer + 2]                  # (1, 4H)   f32
            h_prev = hout_ref[layer]                           # (B, H) f32
            c_prev = cout_ref[layer]                           # (B, H) f32

            # split gate matmul (no lane-axis concat); bf16 in, f32 accumulate
            gates = (jnp.dot(x.astype(w_ih_ref.dtype), w_ih_ref[...],
                             preferred_element_type=jnp.float32)
                     + jnp.dot(h_prev.astype(w_hh_ref.dtype), w_hh_ref[...],
                               preferred_element_type=jnp.float32)
                     + b_ref[...])                             # (B, 4H), [i,f,o,g]

            sig = jax.nn.sigmoid(gates[:, :3 * H])             # i, f, o together
            g_g = jnp.tanh(gates[:, 3 * H:])                   # g only
            i_g = sig[:, 0 * H:1 * H]
            f_g = sig[:, 1 * H:2 * H]
            o_g = sig[:, 2 * H:3 * H]

            c_new = f_g * c_prev + i_g * g_g
            h_new = o_g * jnp.tanh(c_new)

            hout_ref[layer] = h_new                            # VMEM-resident
            cout_ref[layer] = c_new
            x = h_new                                          # next layer in

        # ---- FC to lane-dense padded-vocab logits for this step -------------
        logits_ref[0] = (jnp.dot(x.astype(fcw_ref.dtype), fcw_ref[...],
                                 preferred_element_type=jnp.float32)
                         + fcb_ref[...])

    return kernel


def _full_block_spec(arr):
    """Full-array block, constant index_map (stays VMEM-resident across grid)."""
    nd = arr.ndim
    return pl.BlockSpec(arr.shape, lambda t, tok, _nd=nd: (0,) * _nd)


# --------------------------------- wrappers ---------------------------------

def decode_sequence(params, tokens, hidden, cell):
    """Applies OneStepDecoder.forward (eval mode) once per row of `tokens`,
    carrying (hidden, cell) inside the kernel across the whole sequence.

    tokens: (T, B) int32; hidden, cell: (L, B, H) float32.
    Returns (logits (T, B, V), hidden (L, B, H), cell (L, B, H)).
    """
    T, B = tokens.shape
    L, _, H = hidden.shape
    V = params["embedding"].shape[0]
    V_pad = params["fc_w_t"].shape[1]

    tok_flat = tokens.reshape(T * B).astype(jnp.int32)

    weight_inputs = [params["embedding"], hidden, cell]
    for lp in params["lstm"]:
        weight_inputs += [lp["w_ih_t"], lp["w_hh_t"], lp["bias"]]
    weight_inputs += [params["fc_w_t"], params["fc_b"]]

    in_specs = [_full_block_spec(a) for a in weight_inputs]
    out_specs = (
        pl.BlockSpec((1, B, V_pad), lambda t, tok: (t, 0, 0)),  # per-step logits
        pl.BlockSpec((L, B, H), lambda t, tok: (0, 0, 0)),       # resident h
        pl.BlockSpec((L, B, H), lambda t, tok: (0, 0, 0)),       # resident c
    )

    grid_spec = pltpu.PrefetchScalarGridSpec(
        num_scalar_prefetch=1,
        grid=(T,),
        in_specs=in_specs,
        out_specs=out_specs,
    )

    logits_pad, h_new, c_new = pl.pallas_call(
        _make_decoder_kernel(L, H, B, V),
        grid_spec=grid_spec,
        out_shape=(jax.ShapeDtypeStruct((T, B, V_pad), jnp.float32),
                   jax.ShapeDtypeStruct((L, B, H), jnp.float32),
                   jax.ShapeDtypeStruct((L, B, H), jnp.float32)),
        compiler_params=pltpu.CompilerParams(
            dimension_semantics=("arbitrary",),          # sequential recurrence
            vmem_limit_bytes=32 * 1024 * 1024),
        # in-place state update (input indices count the scalar-prefetch arg):
        # hidden (operand 2) -> h_out (output 1), cell (operand 3) -> c_out (2)
        input_output_aliases={2: 1, 3: 2},
    )(tok_flat, *weight_inputs)

    return logits_pad[:, :, :V], h_new, c_new


def one_step_decoder(params, target_token, hidden, cell):
    """Exact OneStepDecoder.forward (eval mode): one token, one step."""
    logits, h_new, c_new = decode_sequence(params, target_token[None, :],
                                           hidden, cell)
    return logits[0], h_new, c_new


# --------------------------------- params ----------------------------------

def init_params(key, vocab, embed_dim, hidden_dim, n_layers,
                weight_dtype=jnp.bfloat16):
    """Init mirroring the PyTorch module, pre-packed for the fused kernel:
      * embedding kept f32, shaped (V, 1, E) for leading-axis dynamic gather
      * W_ih / W_hh transposed to (D_in, 4H) / (H, 4H), gate order repacked
        from PyTorch's [i, f, g, o] to [i, f, o, g]
      * b_ih + b_hh fused into one (1, 4H) f32 bias (same gate order)
      * FC weight transposed + zero-padded to a 128-multiple vocab width
    """
    keys = jax.random.split(key, 1 + 4 * n_layers + 2)
    ki = iter(keys)
    params = {}

    # nn.Embedding: (V, E), N(0, 1); f32 so the dynamic row gather is clean.
    emb = jax.random.normal(next(ki), (vocab, embed_dim), jnp.float32)
    params["embedding"] = emb.reshape(vocab, 1, embed_dim)

    def reorder_ifgo_to_ifog(w):      # rows/blocks [i,f,g,o] -> [i,f,o,g]
        i, f, g, o = jnp.split(w, 4, axis=0)
        return jnp.concatenate([i, f, o, g], axis=0)

    k = 1.0 / np.sqrt(hidden_dim)
    lstm = []
    for layer in range(n_layers):
        d_in = embed_dim if layer == 0 else hidden_dim
        w_ih = jax.random.uniform(next(ki), (4 * hidden_dim, d_in),
                                  jnp.float32, -k, k)
        w_hh = jax.random.uniform(next(ki), (4 * hidden_dim, hidden_dim),
                                  jnp.float32, -k, k)
        b_ih = jax.random.uniform(next(ki), (4 * hidden_dim,),
                                  jnp.float32, -k, k)
        b_hh = jax.random.uniform(next(ki), (4 * hidden_dim,),
                                  jnp.float32, -k, k)
        lstm.append({
            "w_ih_t": reorder_ifgo_to_ifog(w_ih).T.astype(weight_dtype),
            "w_hh_t": reorder_ifgo_to_ifog(w_hh).T.astype(weight_dtype),
            "bias": reorder_ifgo_to_ifog(b_ih + b_hh).reshape(1, 4 * hidden_dim),
        })
    params["lstm"] = lstm

    kf = 1.0 / np.sqrt(hidden_dim)
    w_fc = jax.random.uniform(next(ki), (vocab, hidden_dim), jnp.float32,
                              -kf, kf)
    b_fc = jax.random.uniform(next(ki), (vocab,), jnp.float32, -kf, kf)
    v_pad = int(np.ceil(vocab / 128.0) * 128)
    fc_w_t = jnp.zeros((hidden_dim, v_pad), jnp.float32).at[:, :vocab].set(w_fc.T)
    fc_b = jnp.zeros((1, v_pad), jnp.float32).at[:, :vocab].set(b_fc)
    params["fc_w_t"] = fc_w_t.astype(weight_dtype)
    params["fc_b"] = fc_b
    return params


# -------------------------------- reference ---------------------------------

def one_step_decoder_ref(params, target_token, hidden, cell):
    """Pure-JAX reference using the same packed (bf16-weight) params."""
    V = params["embedding"].shape[0]
    L, B, H = hidden.shape
    emb2d = params["embedding"].reshape(V, -1)

    x = jnp.take(emb2d, target_token, axis=0)                    # (B, E) f32
    new_h, new_c = [], []
    for layer in range(L):
        lp = params["lstm"][layer]
        gates = (jnp.dot(x.astype(lp["w_ih_t"].dtype), lp["w_ih_t"],
                         preferred_element_type=jnp.float32)
                 + jnp.dot(hidden[layer].astype(lp["w_hh_t"].dtype),
                           lp["w_hh_t"], preferred_element_type=jnp.float32)
                 + lp["bias"])                                   # [i,f,o,g]
        i_g = jax.nn.sigmoid(gates[:, 0 * H:1 * H])
        f_g = jax.nn.sigmoid(gates[:, 1 * H:2 * H])
        o_g = jax.nn.sigmoid(gates[:, 2 * H:3 * H])
        g_g = jnp.tanh(gates[:, 3 * H:4 * H])
        c_l = f_g * cell[layer] + i_g * g_g
        h_l = o_g * jnp.tanh(c_l)
        new_h.append(h_l)
        new_c.append(c_l)
        x = h_l
    logits = (jnp.dot(x.astype(params["fc_w_t"].dtype), params["fc_w_t"],
                      preferred_element_type=jnp.float32)
              + params["fc_b"])[:, :V]
    return logits, jnp.stack(new_h, axis=0), jnp.stack(new_c, axis=0)


def decode_sequence_ref(params, tokens, hidden, cell):
    logits_all = []
    for t in range(tokens.shape[0]):
        logits, hidden, cell = one_step_decoder_ref(params, tokens[t],
                                                    hidden, cell)
        logits_all.append(logits)
    return jnp.stack(logits_all, axis=0), hidden, cell


# ---------------------------------- main ------------------------------------

if __name__ == "__main__":
    VOCAB = 64        # input_output_dim
    EMBED = 32        # embedding_dim
    HIDDEN = 32       # hidden_dim
    N_LAYERS = 2      # n_layers
    BATCH = 8         # B
    STEPS = 6         # decode steps amortized inside one kernel launch

    key = jax.random.PRNGKey(0)
    k_param, k_tok, k_h, k_c = jax.random.split(key, 4)

    params = init_params(k_param, VOCAB, EMBED, HIDDEN, N_LAYERS)
    tokens = jax.random.randint(k_tok, (STEPS, BATCH), 0, VOCAB, jnp.int32)
    hidden = jax.random.normal(k_h, (N_LAYERS, BATCH, HIDDEN), jnp.float32)
    cell = jax.random.normal(k_c, (N_LAYERS, BATCH, HIDDEN), jnp.float32)

    # Pure-JAX references first (hidden/cell get donated to the kernel later).
    logits1_r, h1_r, c1_r = jax.block_until_ready(
        one_step_decoder_ref(params, tokens[0], hidden, cell))
    logitsT_r, hT_r, cT_r = jax.block_until_ready(
        decode_sequence_ref(params, tokens, hidden, cell))

    # Single-step call (original OneStepDecoder.forward API).
    step_fn = jax.jit(one_step_decoder)
    logits1, h1, c1 = jax.block_until_ready(
        step_fn(params, tokens[0], hidden, cell))

    # Full in-kernel decode loop; donate state so the in-place alias is real.
    decode_fn = jax.jit(decode_sequence, donate_argnums=(2, 3))
    logitsT, hT, cT = jax.block_until_ready(
        decode_fn(params, tokens, hidden, cell))

    np.testing.assert_allclose(np.asarray(logits1), np.asarray(logits1_r),
                               rtol=1e-4, atol=1e-4)
    np.testing.assert_allclose(np.asarray(h1), np.asarray(h1_r),
                               rtol=1e-4, atol=1e-4)
    np.testing.assert_allclose(np.asarray(c1), np.asarray(c1_r),
                               rtol=1e-4, atol=1e-4)
    np.testing.assert_allclose(np.asarray(logitsT), np.asarray(logitsT_r),
                               rtol=2e-4, atol=2e-4)
    np.testing.assert_allclose(np.asarray(hT), np.asarray(hT_r),
                               rtol=2e-4, atol=2e-4)
    np.testing.assert_allclose(np.asarray(cT), np.asarray(cT_r),
                               rtol=2e-4, atol=2e-4)

    print("KERNEL_OK")
</pallas_src>

<mosaic_0001>
module attributes {stable_mosaic.version = 11 : i64} {
  func.func @kernel(%arg0: i32, %arg1: memref<8xi32, #tpu.memory_space<smem>>, %arg2: memref<64x1x32xf32, #tpu.memory_space<vmem>>, %arg3: memref<2x8x32xf32, #tpu.memory_space<vmem>>, %arg4: memref<2x8x32xf32, #tpu.memory_space<vmem>>, %arg5: memref<32x128xbf16, #tpu.memory_space<vmem>>, %arg6: memref<32x128xbf16, #tpu.memory_space<vmem>>, %arg7: memref<1x128xf32, #tpu.memory_space<vmem>>, %arg8: memref<32x128xbf16, #tpu.memory_space<vmem>>, %arg9: memref<32x128xbf16, #tpu.memory_space<vmem>>, %arg10: memref<1x128xf32, #tpu.memory_space<vmem>>, %arg11: memref<32x128xbf16, #tpu.memory_space<vmem>>, %arg12: memref<1x128xf32, #tpu.memory_space<vmem>>, %arg13: memref<1x8x128xf32, #tpu.memory_space<vmem>>, %arg14: memref<2x8x32xf32, #tpu.memory_space<vmem>>, %arg15: memref<2x8x32xf32, #tpu.memory_space<vmem>>) attributes {dimension_semantics = [#tpu.dimension_semantics<arbitrary>], iteration_bounds = array<i64: 1>, scalar_prefetch = 1 : i64, scratch_operands = 0 : i64, tpu.core_type = #tpu.core_type<tc>, window_params = [{pipeline_mode = #tpu.pipeline_mode<synchronous>, transform_indices = @transform_0, window_bounds = array<i64: 64, 1, 32>}, {pipeline_mode = #tpu.pipeline_mode<synchronous>, transform_indices = @transform_1, window_bounds = array<i64: 2, 8, 32>}, {pipeline_mode = #tpu.pipeline_mode<synchronous>, transform_indices = @transform_2, window_bounds = array<i64: 2, 8, 32>}, {pipeline_mode = #tpu.pipeline_mode<synchronous>, transform_indices = @transform_3, window_bounds = array<i64: 32, 128>}, {pipeline_mode = #tpu.pipeline_mode<synchronous>, transform_indices = @transform_4, window_bounds = array<i64: 32, 128>}, {pipeline_mode = #tpu.pipeline_mode<synchronous>, transform_indices = @transform_5, window_bounds = array<i64: 1, 128>}, {pipeline_mode = #tpu.pipeline_mode<synchronous>, transform_indices = @transform_6, window_bounds = array<i64: 32, 128>}, {pipeline_mode = #tpu.pipeline_mode<synchronous>, transform_indices = @transform_7, window_bounds = array<i64: 32, 128>}, {pipeline_mode = #tpu.pipeline_mode<synchronous>, transform_indices = @transform_8, window_bounds = array<i64: 1, 128>}, {pipeline_mode = #tpu.pipeline_mode<synchronous>, transform_indices = @transform_9, window_bounds = array<i64: 32, 128>}, {pipeline_mode = #tpu.pipeline_mode<synchronous>, transform_indices = @transform_10, window_bounds = array<i64: 1, 128>}, {transform_indices = @transform_11, window_bounds = array<i64: 1, 8, 128>}, {pipeline_mode = #tpu.pipeline_mode<synchronous>, transform_indices = @transform_12, window_bounds = array<i64: 2, 8, 32>}, {pipeline_mode = #tpu.pipeline_mode<synchronous>, transform_indices = @transform_13, window_bounds = array<i64: 2, 8, 32>}]} {
    %c0_i32 = arith.constant 0 : i32
    %0 = arith.cmpi eq, %arg0, %c0_i32 : i32
    %1 = arith.extui %0 : i1 to i32
    %c0_i32_0 = arith.constant 0 : i32
    %2 = arith.cmpi ne, %1, %c0_i32_0 : i32
    scf.if %2 {
      %c0_87 = arith.constant 0 : index
      %c0_88 = arith.constant 0 : index
      %c0_89 = arith.constant 0 : index
      %157 = vector.load %arg3[%c0_87, %c0_88, %c0_89] : memref<2x8x32xf32, #tpu.memory_space<vmem>>, vector<2x8x32xf32>
      %c0_90 = arith.constant 0 : index
      %c0_91 = arith.constant 0 : index
      %c0_92 = arith.constant 0 : index
      %158 = vector.load %arg14[%c0_90, %c0_91, %c0_92] : memref<2x8x32xf32, #tpu.memory_space<vmem>>, vector<2x8x32xf32>
      tpu.vector_store %arg14[%c0_90, %c0_91, %c0_92], %157 {strides = array<i32>} : memref<2x8x32xf32, #tpu.memory_space<vmem>>, vector<2x8x32xf32>,
      %c0_93 = arith.constant 0 : index
      %c0_94 = arith.constant 0 : index
      %c0_95 = arith.constant 0 : index
      %159 = vector.load %arg4[%c0_93, %c0_94, %c0_95] : memref<2x8x32xf32, #tpu.memory_space<vmem>>, vector<2x8x32xf32>
      %c0_96 = arith.constant 0 : index
      %c0_97 = arith.constant 0 : index
      %c0_98 = arith.constant 0 : index
      %160 = vector.load %arg15[%c0_96, %c0_97, %c0_98] : memref<2x8x32xf32, #tpu.memory_space<vmem>>, vector<2x8x32xf32>
      tpu.vector_store %arg15[%c0_96, %c0_97, %c0_98], %159 {strides = array<i32>} : memref<2x8x32xf32, #tpu.memory_space<vmem>>, vector<2x8x32xf32>,
    } else {
    }
    %c8_i32 = arith.constant 8 : i32
    %3 = arith.muli %arg0, %c8_i32 : i32
    %c0_i32_1 = arith.constant 0 : i32
    %4 = arith.addi %3, %c0_i32_1 : i32
    %5 = arith.index_cast %4 : i32 to index
    %6 = memref.load %arg1[%5] : memref<8xi32, #tpu.memory_space<smem>>
    %c0_i32_2 = arith.constant 0 : i32
    %c63_i32 = arith.constant 63 : i32
    %7 = arith.maxsi %c0_i32_2, %6 : i32
    %8 = arith.minsi %c63_i32, %7 : i32
    %9 = arith.index_cast %8 : i32 to index
    %c0 = arith.constant 0 : index
    %c0_3 = arith.constant 0 : index
    %10 = vector.load %arg2[%9, %c0, %c0_3] : memref<64x1x32xf32, #tpu.memory_space<vmem>>, vector<1x1x32xf32>
    %11 = vector.shape_cast %10 : vector<1x1x32xf32> to vector<1x32xf32>
    %c8_i32_4 = arith.constant 8 : i32
    %12 = arith.muli %arg0, %c8_i32_4 : i32
    %c1_i32 = arith.constant 1 : i32
    %13 = arith.addi %12, %c1_i32 : i32
    %14 = arith.index_cast %13 : i32 to index
    %15 = memref.load %arg1[%14] : memref<8xi32, #tpu.memory_space<smem>>
    %c0_i32_5 = arith.constant 0 : i32
    %c63_i32_6 = arith.constant 63 : i32
    %16 = arith.maxsi %c0_i32_5, %15 : i32
    %17 = arith.minsi %c63_i32_6, %16 : i32
    %18 = arith.index_cast %17 : i32 to index
    %c0_7 = arith.constant 0 : index
    %c0_8 = arith.constant 0 : index
    %19 = vector.load %arg2[%18, %c0_7, %c0_8] : memref<64x1x32xf32, #tpu.memory_space<vmem>>, vector<1x1x32xf32>
    %20 = vector.shape_cast %19 : vector<1x1x32xf32> to vector<1x32xf32>
    %c8_i32_9 = arith.constant 8 : i32
    %21 = arith.muli %arg0, %c8_i32_9 : i32
    %c2_i32 = arith.constant 2 : i32
    %22 = arith.addi %21, %c2_i32 : i32
    %23 = arith.index_cast %22 : i32 to index
    %24 = memref.load %arg1[%23] : memref<8xi32, #tpu.memory_space<smem>>
    %c0_i32_10 = arith.constant 0 : i32
    %c63_i32_11 = arith.constant 63 : i32
    %25 = arith.maxsi %c0_i32_10, %24 : i32
    %26 = arith.minsi %c63_i32_11, %25 : i32
    %27 = arith.index_cast %26 : i32 to index
    %c0_12 = arith.constant 0 : index
    %c0_13 = arith.constant 0 : index
    %28 = vector.load %arg2[%27, %c0_12, %c0_13] : memref<64x1x32xf32, #tpu.memory_space<vmem>>, vector<1x1x32xf32>
    %29 = vector.shape_cast %28 : vector<1x1x32xf32> to vector<1x32xf32>
    %c8_i32_14 = arith.constant 8 : i32
    %30 = arith.muli %arg0, %c8_i32_14 : i32
    %c3_i32 = arith.constant 3 : i32
    %31 = arith.addi %30, %c3_i32 : i32
    %32 = arith.index_cast %31 : i32 to index
    %33 = memref.load %arg1[%32] : memref<8xi32, #tpu.memory_space<smem>>
    %c0_i32_15 = arith.constant 0 : i32
    %c63_i32_16 = arith.constant 63 : i32
    %34 = arith.maxsi %c0_i32_15, %33 : i32
    %35 = arith.minsi %c63_i32_16, %34 : i32
    %36 = arith.index_cast %35 : i32 to index
    %c0_17 = arith.constant 0 : index
    %c0_18 = arith.constant 0 : index
    %37 = vector.load %arg2[%36, %c0_17, %c0_18] : memref<64x1x32xf32, #tpu.memory_space<vmem>>, vector<1x1x32xf32>
    %38 = vector.shape_cast %37 : vector<1x1x32xf32> to vector<1x32xf32>
    %c8_i32_19 = arith.constant 8 : i32
    %39 = arith.muli %arg0, %c8_i32_19 : i32
    %c4_i32 = arith.constant 4 : i32
    %40 = arith.addi %39, %c4_i32 : i32
    %41 = arith.index_cast %40 : i32 to index
    %42 = memref.load %arg1[%41] : memref<8xi32, #tpu.memory_space<smem>>
    %c0_i32_20 = arith.constant 0 : i32
    %c63_i32_21 = arith.constant 63 : i32
    %43 = arith.maxsi %c0_i32_20, %42 : i32
    %44 = arith.minsi %c63_i32_21, %43 : i32
    %45 = arith.index_cast %44 : i32 to index
    %c0_22 = arith.constant 0 : index
    %c0_23 = arith.constant 0 : index
    %46 = vector.load %arg2[%45, %c0_22, %c0_23] : memref<64x1x32xf32, #tpu.memory_space<vmem>>, vector<1x1x32xf32>
    %47 = vector.shape_cast %46 : vector<1x1x32xf32> to vector<1x32xf32>
    %c8_i32_24 = arith.constant 8 : i32
    %48 = arith.muli %arg0, %c8_i32_24 : i32
    %c5_i32 = arith.constant 5 : i32
    %49 = arith.addi %48, %c5_i32 : i32
    %50 = arith.index_cast %49 : i32 to index
    %51 = memref.load %arg1[%50] : memref<8xi32, #tpu.memory_space<smem>>
    %c0_i32_25 = arith.constant 0 : i32
    %c63_i32_26 = arith.constant 63 : i32
    %52 = arith.maxsi %c0_i32_25, %51 : i32
    %53 = arith.minsi %c63_i32_26, %52 : i32
    %54 = arith.index_cast %53 : i32 to index
    %c0_27 = arith.constant 0 : index
    %c0_28 = arith.constant 0 : index
    %55 = vector.load %arg2[%54, %c0_27, %c0_28] : memref<64x1x32xf32, #tpu.memory_space<vmem>>, vector<1x1x32xf32>
    %56 = vector.shape_cast %55 : vector<1x1x32xf32> to vector<1x32xf32>
    %c8_i32_29 = arith.constant 8 : i32
    %57 = arith.muli %arg0, %c8_i32_29 : i32
    %c6_i32 = arith.constant 6 : i32
    %58 = arith.addi %57, %c6_i32 : i32
    %59 = arith.index_cast %58 : i32 to index
    %60 = memref.load %arg1[%59] : memref<8xi32, #tpu.memory_space<smem>>
    %c0_i32_30 = arith.constant 0 : i32
    %c63_i32_31 = arith.constant 63 : i32
    %61 = arith.maxsi %c0_i32_30, %60 : i32
    %62 = arith.minsi %c63_i32_31, %61 : i32
    %63 = arith.index_cast %62 : i32 to index
    %c0_32 = arith.constant 0 : index
    %c0_33 = arith.constant 0 : index
    %64 = vector.load %arg2[%63, %c0_32, %c0_33] : memref<64x1x32xf32, #tpu.memory_space<vmem>>, vector<1x1x32xf32>
    %65 = vector.shape_cast %64 : vector<1x1x32xf32> to vector<1x32xf32>
    %c8_i32_34 = arith.constant 8 : i32
    %66 = arith.muli %arg0, %c8_i32_34 : i32
    %c7_i32 = arith.constant 7 : i32
    %67 = arith.addi %66, %c7_i32 : i32
    %68 = arith.index_cast %67 : i32 to index
    %69 = memref.load %arg1[%68] : memref<8xi32, #tpu.memory_space<smem>>
    %c0_i32_35 = arith.constant 0 : i32
    %c63_i32_36 = arith.constant 63 : i32
    %70 = arith.maxsi %c0_i32_35, %69 : i32
    %71 = arith.minsi %c63_i32_36, %70 : i32
    %72 = arith.index_cast %71 : i32 to index
    %c0_37 = arith.constant 0 : index
    %c0_38 = arith.constant 0 : index
    %73 = vector.load %arg2[%72, %c0_37, %c0_38] : memref<64x1x32xf32, #tpu.memory_space<vmem>>, vector<1x1x32xf32>
    %74 = vector.shape_cast %73 : vector<1x1x32xf32> to vector<1x32xf32>
    %75 = tpu.concatenate %11, %20, %29, %38, %47, %56, %65, %74 in 0 : vector<1x32xf32>, vector<1x32xf32>, vector<1x32xf32>, vector<1x32xf32>, vector<1x32xf32>, vector<1x32xf32>, vector<1x32xf32>, vector<1x32xf32> -> vector<8x32xf32>
    %c0_39 = arith.constant 0 : index
    %c0_40 = arith.constant 0 : index
    %c0_41 = arith.constant 0 : index
    %76 = vector.load %arg14[%c0_39, %c0_40, %c0_41] : memref<2x8x32xf32, #tpu.memory_space<vmem>>, vector<1x8x32xf32>
    %77 = vector.shape_cast %76 : vector<1x8x32xf32> to vector<8x32xf32>
    %c0_42 = arith.constant 0 : index
    %c0_43 = arith.constant 0 : index
    %c0_44 = arith.constant 0 : index
    %78 = vector.load %arg15[%c0_42, %c0_43, %c0_44] : memref<2x8x32xf32, #tpu.memory_space<vmem>>, vector<1x8x32xf32>
    %79 = vector.shape_cast %78 : vector<1x8x32xf32> to vector<8x32xf32>
    %80 = arith.truncf %75 : vector<8x32xf32> to vector<8x32xbf16>
    %c0_45 = arith.constant 0 : index
    %c0_46 = arith.constant 0 : index
    %81 = vector.load %arg5[%c0_45, %c0_46] : memref<32x128xbf16, #tpu.memory_space<vmem>>, vector<32x128xbf16>
    %cst = arith.constant dense<0.000000e+00> : vector<8x128xf32>
    %82 = tpu.matmul %80, %81, %cst {dimension_numbers = #tpu.dot_dimension_numbers<[1], [0], [0], [1], [0, 0, 1, 1], [], []>} : vector<8x32xbf16>, vector<32x128xbf16>, vector<8x128xf32> -> vector<8x128xf32>
    %83 = arith.truncf %77 : vector<8x32xf32> to vector<8x32xbf16>
    %c0_47 = arith.constant 0 : index
    %c0_48 = arith.constant 0 : index
    %84 = vector.load %arg6[%c0_47, %c0_48] : memref<32x128xbf16, #tpu.memory_space<vmem>>, vector<32x128xbf16>
    %cst_49 = arith.constant dense<0.000000e+00> : vector<8x128xf32>
    %85 = tpu.matmul %83, %84, %cst_49 {dimension_numbers = #tpu.dot_dimension_numbers<[1], [0], [0], [1], [0, 0, 1, 1], [], []>} : vector<8x32xbf16>, vector<32x128xbf16>, vector<8x128xf32> -> vector<8x128xf32>
    %86 = arith.addf %82, %85 : vector<8x128xf32>
    %c0_50 = arith.constant 0 : index
    %c0_51 = arith.constant 0 : index
    %87 = vector.load %arg7[%c0_50, %c0_51] : memref<1x128xf32, #tpu.memory_space<vmem>>, vector<1x128xf32>
    %88 = vector.broadcast %87 : vector<1x128xf32> to vector<8x128xf32>
    %89 = arith.addf %86, %88 : vector<8x128xf32>
    %90 = vector.extract_strided_slice %89 {offsets = [0, 0], sizes = [8, 96], strides = [1, 1]} : vector<8x128xf32> to vector<8x96xf32>
    %91 = arith.negf %90 : vector<8x96xf32>
    %92 = math.exp %91 : vector<8x96xf32>
    %cst_52 = arith.constant 1.000000e+00 : f32
    %93 = vector.broadcast %cst_52 : f32 to vector<8x96xf32>
    %94 = arith.addf %93, %92 : vector<8x96xf32>
    %95 = arith.divf %93, %94 : vector<8x96xf32>
    %96 = vector.extract_strided_slice %89 {offsets = [0, 96], sizes = [8, 32], strides = [1, 1]} : vector<8x128xf32> to vector<8x32xf32>
    %97 = math.tanh %96 : vector<8x32xf32>
    %98 = vector.extract_strided_slice %95 {offsets = [0, 0], sizes = [8, 32], strides = [1, 1]} : vector<8x96xf32> to vector<8x32xf32>
    %99 = vector.extract_strided_slice %95 {offsets = [0, 32], sizes = [8, 32], strides = [1, 1]} : vector<8x96xf32> to vector<8x32xf32>
    %100 = vector.extract_strided_slice %95 {offsets = [0, 64], sizes = [8, 32], strides = [1, 1]} : vector<8x96xf32> to vector<8x32xf32>
    %101 = arith.mulf %99, %79 : vector<8x32xf32>
    %102 = arith.mulf %98, %97 : vector<8x32xf32>
    %103 = arith.addf %101, %102 : vector<8x32xf32>
    %104 = math.tanh %103 : vector<8x32xf32>
    %105 = arith.mulf %100, %104 : vector<8x32xf32>
    %c0_53 = arith.constant 0 : index
    %c0_54 = arith.constant 0 : index
    %c0_55 = arith.constant 0 : index
    %106 = vector.load %arg14[%c0_53, %c0_54, %c0_55] : memref<2x8x32xf32, #tpu.memory_space<vmem>>, vector<1x8x32xf32>
    %107 = vector.shape_cast %106 : vector<1x8x32xf32> to vector<8x32xf32>
    %108 = vector.shape_cast %105 : vector<8x32xf32> to vector<1x8x32xf32>
    tpu.vector_store %arg14[%c0_53, %c0_54, %c0_55], %108 {strides = array<i32>} : memref<2x8x32xf32, #tpu.memory_space<vmem>>, vector<1x8x32xf32>,
    %c0_56 = arith.constant 0 : index
    %c0_57 = arith.constant 0 : index
    %c0_58 = arith.constant 0 : index
    %109 = vector.load %arg15[%c0_56, %c0_57, %c0_58] : memref<2x8x32xf32, #tpu.memory_space<vmem>>, vector<1x8x32xf32>
    %110 = vector.shape_cast %109 : vector<1x8x32xf32> to vector<8x32xf32>
    %111 = vector.shape_cast %103 : vector<8x32xf32> to vector<1x8x32xf32>
    tpu.vector_store %arg15[%c0_56, %c0_57, %c0_58], %111 {strides = array<i32>} : memref<2x8x32xf32, #tpu.memory_space<vmem>>, vector<1x8x32xf32>,
    %c1 = arith.constant 1 : index
    %c0_59 = arith.constant 0 : index
    %c0_60 = arith.constant 0 : index
    %112 = vector.load %arg14[%c1, %c0_59, %c0_60] : memref<2x8x32xf32, #tpu.memory_space<vmem>>, vector<1x8x32xf32>
    %113 = vector.shape_cast %112 : vector<1x8x32xf32> to vector<8x32xf32>
    %c1_61 = arith.constant 1 : index
    %c0_62 = arith.constant 0 : index
    %c0_63 = arith.constant 0 : index
    %114 = vector.load %arg15[%c1_61, %c0_62, %c0_63] : memref<2x8x32xf32, #tpu.memory_space<vmem>>, vector<1x8x32xf32>
    %115 = vector.shape_cast %114 : vector<1x8x32xf32> to vector<8x32xf32>
    %116 = arith.truncf %105 : vector<8x32xf32> to vector<8x32xbf16>
    %c0_64 = arith.constant 0 : index
    %c0_65 = arith.constant 0 : index
    %117 = vector.load %arg8[%c0_64, %c0_65] : memref<32x128xbf16, #tpu.memory_space<vmem>>, vector<32x128xbf16>
    %cst_66 = arith.constant dense<0.000000e+00> : vector<8x128xf32>
    %118 = tpu.matmul %116, %117, %cst_66 {dimension_numbers = #tpu.dot_dimension_numbers<[1], [0], [0], [1], [0, 0, 1, 1], [], []>} : vector<8x32xbf16>, vector<32x128xbf16>, vector<8x128xf32> -> vector<8x128xf32>
    %119 = arith.truncf %113 : vector<8x32xf32> to vector<8x32xbf16>
    %c0_67 = arith.constant 0 : index
    %c0_68 = arith.constant 0 : index
    %120 = vector.load %arg9[%c0_67, %c0_68] : memref<32x128xbf16, #tpu.memory_space<vmem>>, vector<32x128xbf16>
    %cst_69 = arith.constant dense<0.000000e+00> : vector<8x128xf32>
    %121 = tpu.matmul %119, %120, %cst_69 {dimension_numbers = #tpu.dot_dimension_numbers<[1], [0], [0], [1], [0, 0, 1, 1], [], []>} : vector<8x32xbf16>, vector<32x128xbf16>, vector<8x128xf32> -> vector<8x128xf32>
    %122 = arith.addf %118, %121 : vector<8x128xf32>
    %c0_70 = arith.constant 0 : index
    %c0_71 = arith.constant 0 : index
    %123 = vector.load %arg10[%c0_70, %c0_71] : memref<1x128xf32, #tpu.memory_space<vmem>>, vector<1x128xf32>
    %124 = vector.broadcast %123 : vector<1x128xf32> to vector<8x128xf32>
    %125 = arith.addf %122, %124 : vector<8x128xf32>
    %126 = vector.extract_strided_slice %125 {offsets = [0, 0], sizes = [8, 96], strides = [1, 1]} : vector<8x128xf32> to vector<8x96xf32>
    %127 = arith.negf %126 : vector<8x96xf32>
    %128 = math.exp %127 : vector<8x96xf32>
    %cst_72 = arith.constant 1.000000e+00 : f32
    %129 = vector.broadcast %cst_72 : f32 to vector<8x96xf32>
    %130 = arith.addf %129, %128 : vector<8x96xf32>
    %131 = arith.divf %129, %130 : vector<8x96xf32>
    %132 = vector.extract_strided_slice %125 {offsets = [0, 96], sizes = [8, 32], strides = [1, 1]} : vector<8x128xf32> to vector<8x32xf32>
    %133 = math.tanh %132 : vector<8x32xf32>
    %134 = vector.extract_strided_slice %131 {offsets = [0, 0], sizes = [8, 32], strides = [1, 1]} : vector<8x96xf32> to vector<8x32xf32>
    %135 = vector.extract_strided_slice %131 {offsets = [0, 32], sizes = [8, 32], strides = [1, 1]} : vector<8x96xf32> to vector<8x32xf32>
    %136 = vector.extract_strided_slice %131 {offsets = [0, 64], sizes = [8, 32], strides = [1, 1]} : vector<8x96xf32> to vector<8x32xf32>
    %137 = arith.mulf %135, %115 : vector<8x32xf32>
    %138 = arith.mulf %134, %133 : vector<8x32xf32>
    %139 = arith.addf %137, %138 : vector<8x32xf32>
    %140 = math.tanh %139 : vector<8x32xf32>
    %141 = arith.mulf %136, %140 : vector<8x32xf32>
    %c1_73 = arith.constant 1 : index
    %c0_74 = arith.constant 0 : index
    %c0_75 = arith.constant 0 : index
    %142 = vector.load %arg14[%c1_73, %c0_74, %c0_75] : memref<2x8x32xf32, #tpu.memory_space<vmem>>, vector<1x8x32xf32>
    %143 = vector.shape_cast %142 : vector<1x8x32xf32> to vector<8x32xf32>
    %144 = vector.shape_cast %141 : vector<8x32xf32> to vector<1x8x32xf32>
    tpu.vector_store %arg14[%c1_73, %c0_74, %c0_75], %144 {strides = array<i32>} : memref<2x8x32xf32, #tpu.memory_space<vmem>>, vector<1x8x32xf32>,
    %c1_76 = arith.constant 1 : index
    %c0_77 = arith.constant 0 : index
    %c0_78 = arith.constant 0 : index
    %145 = vector.load %arg15[%c1_76, %c0_77, %c0_78] : memref<2x8x32xf32, #tpu.memory_space<vmem>>, vector<1x8x32xf32>
    %146 = vector.shape_cast %145 : vector<1x8x32xf32> to vector<8x32xf32>
    %147 = vector.shape_cast %139 : vector<8x32xf32> to vector<1x8x32xf32>
    tpu.vector_store %arg15[%c1_76, %c0_77, %c0_78], %147 {strides = array<i32>} : memref<2x8x32xf32, #tpu.memory_space<vmem>>, vector<1x8x32xf32>,
    %148 = arith.truncf %141 : vector<8x32xf32> to vector<8x32xbf16>
    %c0_79 = arith.constant 0 : index
    %c0_80 = arith.constant 0 : index
    %149 = vector.load %arg11[%c0_79, %c0_80] : memref<32x128xbf16, #tpu.memory_space<vmem>>, vector<32x128xbf16>
    %cst_81 = arith.constant dense<0.000000e+00> : vector<8x128xf32>
    %150 = tpu.matmul %148, %149, %cst_81 {dimension_numbers = #tpu.dot_dimension_numbers<[1], [0], [0], [1], [0, 0, 1, 1], [], []>} : vector<8x32xbf16>, vector<32x128xbf16>, vector<8x128xf32> -> vector<8x128xf32>
    %c0_82 = arith.constant 0 : index
    %c0_83 = arith.constant 0 : index
    %151 = vector.load %arg12[%c0_82, %c0_83] : memref<1x128xf32, #tpu.memory_space<vmem>>, vector<1x128xf32>
    %152 = vector.broadcast %151 : vector<1x128xf32> to vector<8x128xf32>
    %153 = arith.addf %150, %152 : vector<8x128xf32>
    %c0_84 = arith.constant 0 : index
    %c0_85 = arith.constant 0 : index
    %c0_86 = arith.constant 0 : index
    %154 = vector.load %arg13[%c0_84, %c0_85, %c0_86] : memref<1x8x128xf32, #tpu.memory_space<vmem>>, vector<1x8x128xf32>
    %155 = vector.shape_cast %154 : vector<1x8x128xf32> to vector<8x128xf32>
    %156 = vector.shape_cast %153 : vector<8x128xf32> to vector<1x8x128xf32>
    tpu.vector_store %arg13[%c0_84, %c0_85, %c0_86], %156 {strides = array<i32>} : memref<1x8x128xf32, #tpu.memory_space<vmem>>, vector<1x8x128xf32>,
    return
  }
  func.func @transform_0(%arg0: i32, %arg1: memref<8xi32, #tpu.memory_space<smem>>) -> (i32, i32, i32) {
    %c0_i32 = arith.constant 0 : i32
    %c0_i32_0 = arith.constant 0 : i32
    %c0_i32_1 = arith.constant 0 : i32
    %c0_i32_2 = arith.constant 0 : i32
    return %c0_i32, %c0_i32_0, %c0_i32_1 : i32, i32, i32
  }
  func.func @transform_1(%arg0: i32, %arg1: memref<8xi32, #tpu.memory_space<smem>>) -> (i32, i32, i32) {
    %c0_i32 = arith.constant 0 : i32
    %c0_i32_0 = arith.constant 0 : i32
    %c0_i32_1 = arith.constant 0 : i32
    %c0_i32_2 = arith.constant 0 : i32
    return %c0_i32, %c0_i32_0, %c0_i32_1 : i32, i32, i32
  }
  func.func @transform_2(%arg0: i32, %arg1: memref<8xi32, #tpu.memory_space<smem>>) -> (i32, i32, i32) {
    %c0_i32 = arith.constant 0 : i32
    %c0_i32_0 = arith.constant 0 : i32
    %c0_i32_1 = arith.constant 0 : i32
    %c0_i32_2 = arith.constant 0 : i32
    return %c0_i32, %c0_i32_0, %c0_i32_1 : i32, i32, i32
  }
  func.func @transform_3(%arg0: i32, %arg1: memref<8xi32, #tpu.memory_space<smem>>) -> (i32, i32) {
    %c0_i32 = arith.constant 0 : i32
    %c0_i32_0 = arith.constant 0 : i32
    %c0_i32_1 = arith.constant 0 : i32
    return %c0_i32, %c0_i32_0 : i32, i32
  }
  func.func @transform_4(%arg0: i32, %arg1: memref<8xi32, #tpu.memory_space<smem>>) -> (i32, i32) {
    %c0_i32 = arith.constant 0 : i32
    %c0_i32_0 = arith.constant 0 : i32
    %c0_i32_1 = arith.constant 0 : i32
    return %c0_i32, %c0_i32_0 : i32, i32
  }
  func.func @transform_5(%arg0: i32, %arg1: memref<8xi32, #tpu.memory_space<smem>>) -> (i32, i32) {
    %c0_i32 = arith.constant 0 : i32
    %c0_i32_0 = arith.constant 0 : i32
    %c0_i32_1 = arith.constant 0 : i32
    return %c0_i32, %c0_i32_0 : i32, i32
  }
  func.func @transform_6(%arg0: i32, %arg1: memref<8xi32, #tpu.memory_space<smem>>) -> (i32, i32) {
    %c0_i32 = arith.constant 0 : i32
    %c0_i32_0 = arith.constant 0 : i32
    %c0_i32_1 = arith.constant 0 : i32
    return %c0_i32, %c0_i32_0 : i32, i32
  }
  func.func @transform_7(%arg0: i32, %arg1: memref<8xi32, #tpu.memory_space<smem>>) -> (i32, i32) {
    %c0_i32 = arith.constant 0 : i32
    %c0_i32_0 = arith.constant 0 : i32
    %c0_i32_1 = arith.constant 0 : i32
    return %c0_i32, %c0_i32_0 : i32, i32
  }
  func.func @transform_8(%arg0: i32, %arg1: memref<8xi32, #tpu.memory_space<smem>>) -> (i32, i32) {
    %c0_i32 = arith.constant 0 : i32
    %c0_i32_0 = arith.constant 0 : i32
    %c0_i32_1 = arith.constant 0 : i32
    return %c0_i32, %c0_i32_0 : i32, i32
  }
  func.func @transform_9(%arg0: i32, %arg1: memref<8xi32, #tpu.memory_space<smem>>) -> (i32, i32) {
    %c0_i32 = arith.constant 0 : i32
    %c0_i32_0 = arith.constant 0 : i32
    %c0_i32_1 = arith.constant 0 : i32
    return %c0_i32, %c0_i32_0 : i32, i32
  }
  func.func @transform_10(%arg0: i32, %arg1: memref<8xi32, #tpu.memory_space<smem>>) -> (i32, i32) {
    %c0_i32 = arith.constant 0 : i32
    %c0_i32_0 = arith.constant 0 : i32
    %c0_i32_1 = arith.constant 0 : i32
    return %c0_i32, %c0_i32_0 : i32, i32
  }
  func.func @transform_11(%arg0: i32, %arg1: memref<8xi32, #tpu.memory_space<smem>>) -> (i32, i32, i32) {
    %c0_i32 = arith.constant 0 : i32
    %c0_i32_0 = arith.constant 0 : i32
    %c0_i32_1 = arith.constant 0 : i32
    return %arg0, %c0_i32, %c0_i32_0 : i32, i32, i32
  }
  func.func @transform_12(%arg0: i32, %arg1: memref<8xi32, #tpu.memory_space<smem>>) -> (i32, i32, i32) {
    %c0_i32 = arith.constant 0 : i32
    %c0_i32_0 = arith.constant 0 : i32
    %c0_i32_1 = arith.constant 0 : i32
    %c0_i32_2 = arith.constant 0 : i32
    return %c0_i32, %c0_i32_0, %c0_i32_1 : i32, i32, i32
  }
  func.func @transform_13(%arg0: i32, %arg1: memref<8xi32, #tpu.memory_space<smem>>) -> (i32, i32, i32) {
    %c0_i32 = arith.constant 0 : i32
    %c0_i32_0 = arith.constant 0 : i32
    %c0_i32_1 = arith.constant 0 : i32
    %c0_i32_2 = arith.constant 0 : i32
    return %c0_i32, %c0_i32_0, %c0_i32_1 : i32, i32, i32
  }
}

</mosaic_0001>

<llo_original>
// kernel: one_step_decoder.1
$region0: #{one_step_decoder.1}
  #allocation0 [shape = 'u32[]', space=smem, size = 0x4, offset = 0x4, fixed_abs, tag = 'smem constant byte address 0x4 - core index']
  #allocation1 [shape = 'u32[144,128]{1,0:T(1,128)}', space=vmem, size = 0x12000, scoped, tag = 'internal scratch']
  #allocation2 [shape = 's32[1]{0}', space=sflag, size = 0x4, scoped, tag = 'scoped memory for one_step_decoder.1']
  #allocation3 [shape = 'u8[512]{0}', space=smem, size = 0x200, scoped, tag = 'prefetched SMEM operand 0']
  %s0 = inlined_call_operand.vmem [shape: s32[8], index: 0, kind: input, shape index: {}]
  %s1 = inlined_call_operand.vmem [shape: f32[64,1,32], index: 1, kind: input, shape index: {}]
  %s2 = inlined_call_operand.vmem [shape: f32[2,8,32], index: 2, kind: input, shape index: {}, may-alias: {2,13}]
  %s3 = inlined_call_operand.vmem [shape: f32[2,8,32], index: 3, kind: input, shape index: {}, may-alias: {3,14}]
  %s4 = inlined_call_operand.vmem [shape: bf16[32,128], index: 4, kind: input, shape index: {}]
  %s5 = inlined_call_operand.vmem [shape: bf16[32,128], index: 5, kind: input, shape index: {}]
  %s6 = inlined_call_operand.vmem [shape: f32[1,128], index: 6, kind: input, shape index: {}]
  %s7 = inlined_call_operand.vmem [shape: bf16[32,128], index: 7, kind: input, shape index: {}]
  %s8 = inlined_call_operand.vmem [shape: bf16[32,128], index: 8, kind: input, shape index: {}]
  %s9 = inlined_call_operand.vmem [shape: f32[1,128], index: 9, kind: input, shape index: {}]
  %s10 = inlined_call_operand.vmem [shape: bf16[32,128], index: 10, kind: input, shape index: {}]
  %s11 = inlined_call_operand.vmem [shape: f32[1,128], index: 11, kind: input, shape index: {}]
  %s12 = inlined_call_operand.vmem [shape: f32[1,8,128], index: 12, kind: output, shape index: {0}]
  %s13 = inlined_call_operand.vmem [shape: f32[2,8,32], index: 13, kind: output, shape index: {1}, may-alias: {2,13}]
  %s14 = inlined_call_operand.vmem [shape: f32[2,8,32], index: 14, kind: output, shape index: {2}, may-alias: {3,14}]
  %15 = xla_tuple %s12, %s13, %s14
  %s16 = sld [smem:[#allocation0]]
  $region74: #{one_step_decoder.1} parent=0
    _
  %s18 = ssub.s32 1, %s16
  %s19 = scalar_select 0, %s18, %s16
  %s20 = sshll.u32 %s0, 4
  %s21 = int_to_ptr.vmem [resolvable:$true] %s20
  %23 = dma.vmem_to_smem %s21, 16, [#allocation3], [#allocation2]
  %24 = dma.done [#allocation2], 16
  %25 = sfence
  // Predicated region
  $region2: #{one_step_decoder.1} parent=0 // pred_check
    _
  $region3: #{one_step_decoder.1} parent=0 // pred_check_branch
    %27 = sbr.rel (0) target = $region5
  $region4: #{one_step_decoder.1} parent=0 // pred_region
    _
  $region5: #{one_step_decoder.1} parent=0 // pred_fallthru
    _
  // Predicated region
  $region6: #{one_step_decoder.1} parent=0 // pred_check
    _
  $region7: #{one_step_decoder.1} parent=0 // pred_check_branch
    %29 = sbr.rel (0) target = $region9
  $region8: #{one_step_decoder.1} parent=0 // pred_region
    _
  $region9: #{one_step_decoder.1} parent=0 // pred_fallthru
    _
  // Predicated region
  $region10: #{one_step_decoder.1} parent=0 // pred_check
    _
  $region11: #{one_step_decoder.1} parent=0 // pred_check_branch
    %31 = sbr.rel (0) target = $region13
  $region12: #{one_step_decoder.1} parent=0 // pred_region
    _
  $region13: #{one_step_decoder.1} parent=0 // pred_fallthru
    _
  // Predicated region
  $region14: #{one_step_decoder.1} parent=0 // pred_check
    _
  $region15: #{one_step_decoder.1} parent=0 // pred_check_branch
    %33 = sbr.rel (0) target = $region17
  $region16: #{one_step_decoder.1} parent=0 // pred_region
    _
  $region17: #{one_step_decoder.1} parent=0 // pred_fallthru
    _
  // Predicated region
  $region18: #{one_step_decoder.1} parent=0 // pred_check
    _
  $region19: #{one_step_decoder.1} parent=0 // pred_check_branch
    %35 = sbr.rel (0) target = $region21
  $region20: #{one_step_decoder.1} parent=0 // pred_region
    _
  $region21: #{one_step_decoder.1} parent=0 // pred_fallthru
    _
  // Predicated region
  $region22: #{one_step_decoder.1} parent=0 // pred_check
    _
  $region23: #{one_step_decoder.1} parent=0 // pred_check_branch
    %37 = sbr.rel (0) target = $region25
  $region24: #{one_step_decoder.1} parent=0 // pred_region
    _
  $region25: #{one_step_decoder.1} parent=0 // pred_fallthru
    _
  // Predicated region
  $region26: #{one_step_decoder.1} parent=0 // pred_check
    _
  $region27: #{one_step_decoder.1} parent=0 // pred_check_branch
    %39 = sbr.rel (0) target = $region29
  $region28: #{one_step_decoder.1} parent=0 // pred_region
    _
  $region29: #{one_step_decoder.1} parent=0 // pred_fallthru
    _
  // Predicated region
  $region30: #{one_step_decoder.1} parent=0 // pred_check
    _
  $region31: #{one_step_decoder.1} parent=0 // pred_check_branch
    %41 = sbr.rel (0) target = $region33
  $region32: #{one_step_decoder.1} parent=0 // pred_region
    _
  $region33: #{one_step_decoder.1} parent=0 // pred_fallthru
    _
  // Predicated region
  $region34: #{one_step_decoder.1} parent=0 // pred_check
    _
  $region35: #{one_step_decoder.1} parent=0 // pred_check_branch
    %43 = sbr.rel (0) target = $region37
  $region36: #{one_step_decoder.1} parent=0 // pred_region
    _
  $region37: #{one_step_decoder.1} parent=0 // pred_fallthru
    _
  // Predicated region
  $region38: #{one_step_decoder.1} parent=0 // pred_check
    _
  $region39: #{one_step_decoder.1} parent=0 // pred_check_branch
    %45 = sbr.rel (0) target = $region41
  $region40: #{one_step_decoder.1} parent=0 // pred_region
    _
  $region41: #{one_step_decoder.1} parent=0 // pred_fallthru
    _
  // Predicated region
  $region42: #{one_step_decoder.1} parent=0 // pred_check
    _
  $region43: #{one_step_decoder.1} parent=0 // pred_check_branch
    %47 = sbr.rel (0) target = $region45
  $region44: #{one_step_decoder.1} parent=0 // pred_region
    _
  $region45: #{one_step_decoder.1} parent=0 // pred_fallthru
    _
  %p49 = scmp.eq.s32.totalorder 0, 0
  // Predicated region
  $region46: #{one_step_decoder.1} parent=0 // pred_check
    %p50 = pneg %p49
  $region47: #{one_step_decoder.1} parent=0 // pred_check_branch
    %52 = sbr.rel (%p50) target = $region49
  $region48: #{one_step_decoder.1} parent=0 // pred_region
    %v53 = vld [vmem:[%s2] sm:$0xff]
    %v54 = vld [vmem:[%s2 + $0x8] sm:$0xff]
    %vm55 = vcmask 261120
    %56 = vst.msk [vmem:[%s13] sm:$0xff] %vm55, %v53
    %57 = vst.msk [vmem:[%s13 + $0x8] sm:$0xff] %vm55, %v54
    %v58 = vld [vmem:[%s3] sm:$0xff]
    %v59 = vld [vmem:[%s3 + $0x8] sm:$0xff]
    %60 = vst.msk [vmem:[%s14] sm:$0xff] %vm55, %v58
    %61 = vst.msk [vmem:[%s14 + $0x8] sm:$0xff] %vm55, %v59
  $region49: #{one_step_decoder.1} parent=0 // pred_fallthru
    _
  %s62 = smul.u32 0, 8
  %s63 = sld [smem:[#allocation3 + %s62]]
  %p64 = scmp.gt.s32.totalorder %s63, 0
  %s65 = scalar_select %p64, %s63, 0
  %p66 = scmp.lt.s32.totalorder %s65, 63
  %s67 = scalar_select %p66, %s65, 63
  %s68 = scalar_lea.vmem %s1, %s67
  %v69 = vld [vmem:[%s68] sm:$0x1]
  %s70 = sadd.s32 %s62, 1
  %s71 = sld [smem:[#allocation3 + %s70]]
  %p72 = scmp.gt.s32.totalorder %s71, 0
  %s73 = scalar_select %p72, %s71, 0
  %p74 = scmp.lt.s32.totalorder %s73, 63
  %s75 = scalar_select %p74, %s73, 63
  %s76 = scalar_lea.vmem %s1, %s75
  %v77 = vld [vmem:[%s76] sm:$0x1]
  %s78 = sadd.s32 %s62, 2
  %s79 = sld [smem:[#allocation3 + %s78]]
  %p80 = scmp.gt.s32.totalorder %s79, 0
  %s81 = scalar_select %p80, %s79, 0
  %p82 = scmp.lt.s32.totalorder %s81, 63
  %s83 = scalar_select %p82, %s81, 63
  %s84 = scalar_lea.vmem %s1, %s83
  %v85 = vld [vmem:[%s84] sm:$0x1]
  %s86 = sadd.s32 %s62, 3
  %s87 = sld [smem:[#allocation3 + %s86]]
  %p88 = scmp.gt.s32.totalorder %s87, 0
  %s89 = scalar_select %p88, %s87, 0
  %p90 = scmp.lt.s32.totalorder %s89, 63
  %s91 = scalar_select %p90, %s89, 63
  %s92 = scalar_lea.vmem %s1, %s91
  %v93 = vld [vmem:[%s92] sm:$0x1]
  %s94 = sadd.s32 %s62, 4
  %s95 = sld [smem:[#allocation3 + %s94]]
  %p96 = scmp.gt.s32.totalorder %s95, 0
  %s97 = scalar_select %p96, %s95, 0
  %p98 = scmp.lt.s32.totalorder %s97, 63
  %s99 = scalar_select %p98, %s97, 63
  %s100 = scalar_lea.vmem %s1, %s99
  %v101 = vld [vmem:[%s100] sm:$0x1]
  %s102 = sadd.s32 %s62, 5
  %s103 = sld [smem:[#allocation3 + %s102]]
  %p104 = scmp.gt.s32.totalorder %s103, 0
  %s105 = scalar_select %p104, %s103, 0
  %p106 = scmp.lt.s32.totalorder %s105, 63
  %s107 = scalar_select %p106, %s105, 63
  %s108 = scalar_lea.vmem %s1, %s107
  %v109 = vld [vmem:[%s108] sm:$0x1]
  %s110 = sadd.s32 %s62, 6
  %s111 = sld [smem:[#allocation3 + %s110]]
  %p112 = scmp.gt.s32.totalorder %s111, 0
  %s113 = scalar_select %p112, %s111, 0
  %p114 = scmp.lt.s32.totalorder %s113, 63
  %s115 = scalar_select %p114, %s113, 63
  %s116 = scalar_lea.vmem %s1, %s115
  %v117 = vld [vmem:[%s116] sm:$0x1]
  %s118 = sadd.s32 %s62, 7
  %s119 = sld [smem:[#allocation3 + %s118]]
  %p120 = scmp.gt.s32.totalorder %s119, 0
  %s121 = scalar_select %p120, %s119, 0
  %p122 = scmp.lt.s32.totalorder %s121, 63
  %s123 = scalar_select %p122, %s121, 63
  %s124 = scalar_lea.vmem %s1, %s123
  %v125 = vld [vmem:[%s124] sm:$0x1]
  %v127 = vlaneseq
  %v128 = vshrl.u32 %v127, 7
  %v129 = vsub.s32 0, %v128
  %v130 = vrot.slane %v77, %v129
  %v133 = vlaneseq
  %v134 = vshrl.u32 %v133, 7
  %v135 = vsub.s32 0, %v134
  %v136 = vrot.slane %v85, %v135
  %v139 = vlaneseq
  %v140 = vshrl.u32 %v139, 7
  %v141 = vsub.s32 0, %v140
  %v142 = vrot.slane %v93, %v141
  %v145 = vlaneseq
  %v146 = vshrl.u32 %v145, 7
  %v147 = vsub.s32 0, %v146
  %v148 = vrot.slane %v101, %v147
  %v151 = vlaneseq
  %v152 = vshrl.u32 %v151, 7
  %v153 = vsub.s32 0, %v152
  %v154 = vrot.slane %v109, %v153
  %v157 = vlaneseq
  %v158 = vshrl.u32 %v157, 7
  %v159 = vsub.s32 0, %v158
  %v160 = vrot.slane %v117, %v159
  %v163 = vlaneseq
  %v164 = vshrl.u32 %v163, 7
  %v165 = vsub.s32 0, %v164
  %v166 = vrot.slane %v125, %v165
  %vm168 = vcmask 1040384
  %v169 = vsel %vm168, %v69, %v130
  %vm170 = vcmask 1041408
  %v171 = vsel %vm170, %v169, %v136
  %vm172 = vcmask 1042432
  %v173 = vsel %vm172, %v171, %v142
  %vm174 = vcmask 1043456
  %v175 = vsel %vm174, %v173, %v148
  %vm176 = vcmask 1044480
  %v177 = vsel %vm176, %v175, %v154
  %vm178 = vcmask 1045504
  %v179 = vsel %vm178, %v177, %v160
  %vm180 = vcmask 1046528
  %v181 = vsel %vm180, %v179, %v166
  %v182 = vld [vmem:[%s13] sm:$0xff]
  %v183 = vld [vmem:[%s14] sm:$0xff]
  %v184 = vpack.c.bf16 %v181, %v181
  %v185 = vld [vmem:[%s4] sm:$0xf]
  %v186 = vld [vmem:[%s4 + $0x4] sm:$0xf]
  %v187 = vld [vmem:[%s4 + $0x8] sm:$0xf]
  %v188 = vld [vmem:[%s4 + $0xc] sm:$0xf]
  %v189 = vpack.c.bf16 %v182, %v182
  %v190 = vld [vmem:[%s5] sm:$0xf]
  %v191 = vld [vmem:[%s5 + $0x4] sm:$0xf]
  %v192 = vld [vmem:[%s5 + $0x8] sm:$0xf]
  %v193 = vld [vmem:[%s5 + $0xc] sm:$0xf]
  %v198 = vunpack.c.l.b16 %v190
  %v199 = vunpack.c.l.b16 %v191
  %v200 = vunpack.c.l.b16 %v192
  %v201 = vunpack.c.l.b16 %v193
  %v202 = vpack.c.b16 %v199, %v198
  %v203 = vpack.c.b16 %v201, %v200
  %vm206 = vcmask 261120
  %v208 = vsel %vm206, %v189, 0
  %210 = vmatprep.subr.bf16.mxu0 0
  %211 = vmatpush1.bf16.msra.mxu0 0
  %212 = vmatprep.subr.bf16.mxu0 0
  %213 = vmatpush1.bf16.msra.mxu0 0
  %214 = vmatprep.subr.bf16.mxu0 0
  %215 = vmatpush1.bf16.msra.mxu0 0
  %216 = vmatprep.subr.bf16.mxu0 0
  %217 = vmatpush1.bf16.msra.mxu0 0
  %218 = vmatprep.subr.bf16.mxu0 0
  %219 = vmatpush1.bf16.msra.mxu0 0
  %220 = vmatprep.subr.bf16.mxu0 0
  %221 = vmatpush1.bf16.msra.mxu0 0
  %222 = vmatprep.subr.bf16.mxu0 0
  %223 = vmatpush1.bf16.msra.mxu0 %v203
  %224 = vmatprep.subr.bf16.mxu0 0
  %225 = vmatpush1.bf16.msra.mxu0 %v202
  %226 = vmatprep.subr.bf16.mxu0 0
  %227 = vmatpush2.bf16.msra.mxu0 0
  %228 = vmatprep.subr.bf16.mxu0 0
  %229 = vmatpush2.bf16.msra.mxu0 0
  %230 = vmatprep.subr.bf16.mxu0 0
  %231 = vmatpush2.bf16.msra.mxu0 0
  %232 = vmatprep.subr.bf16.mxu0 0
  %233 = vmatpush2.bf16.msra.mxu0 0
  %234 = vmatprep.subr.bf16.mxu0 0
  %235 = vmatpush2.bf16.msra.mxu0 0
  %236 = vmatprep.subr.bf16.mxu0 0
  %237 = vmatpush2.bf16.msra.mxu0 0
  %238 = vmatprep.subr.bf16.mxu0 0
  %239 = vmatpush2.bf16.msra.mxu0 0
  %240 = vmatprep.subr.bf16.mxu0 0
  %241 = vmatpush2.bf16.msra.mxu0 0
  %242 = vmatprep.mubr.bf16.mxu0 0
  %243 = vmatmul.mubr.bf16.gmra.mxu0 %v208
  %v244 = vpop.f32.mrf.mxu0
  %v245 = vadd.f32 0.0, %v244
  %v246 = vpop.f32.mrf.mxu0
  %v247 = vpop.f32.mrf.mxu0
  %v248 = vpop.f32.mrf.mxu0
  %249 = vdwg.mxu0
  %v254 = vunpack.c.l.b16 %v185
  %v255 = vunpack.c.l.b16 %v186
  %v256 = vunpack.c.l.b16 %v187
  %v257 = vunpack.c.l.b16 %v188
  %v258 = vpack.c.b16 %v255, %v254
  %v259 = vpack.c.b16 %v257, %v256
  %v263 = vsel %vm206, %v184, 0
  %265 = vmatprep.subr.bf16.mxu0 0
  %266 = vmatpush1.bf16.msra.mxu0 0
  %267 = vmatprep.subr.bf16.mxu0 0
  %268 = vmatpush1.bf16.msra.mxu0 0
  %269 = vmatprep.subr.bf16.mxu0 0
  %270 = vmatpush1.bf16.msra.mxu0 0
  %271 = vmatprep.subr.bf16.mxu0 0
  %272 = vmatpush1.bf16.msra.mxu0 0
  %273 = vmatprep.subr.bf16.mxu0 0
  %274 = vmatpush1.bf16.msra.mxu0 0
  %275 = vmatprep.subr.bf16.mxu0 0
  %276 = vmatpush1.bf16.msra.mxu0 0
  %277 = vmatprep.subr.bf16.mxu0 0
  %278 = vmatpush1.bf16.msra.mxu0 %v259
  %279 = vmatprep.subr.bf16.mxu0 0
  %280 = vmatpush1.bf16.msra.mxu0 %v258
  %281 = vmatprep.subr.bf16.mxu0 0
  %282 = vmatpush2.bf16.msra.mxu0 0
  %283 = vmatprep.subr.bf16.mxu0 0
  %284 = vmatpush2.bf16.msra.mxu0 0
  %285 = vmatprep.subr.bf16.mxu0 0
  %286 = vmatpush2.bf16.msra.mxu0 0
  %287 = vmatprep.subr.bf16.mxu0 0
  %288 = vmatpush2.bf16.msra.mxu0 0
  %289 = vmatprep.subr.bf16.mxu0 0
  %290 = vmatpush2.bf16.msra.mxu0 0
  %291 = vmatprep.subr.bf16.mxu0 0
  %292 = vmatpush2.bf16.msra.mxu0 0
  %293 = vmatprep.subr.bf16.mxu0 0
  %294 = vmatpush2.bf16.msra.mxu0 0
  %295 = vmatprep.subr.bf16.mxu0 0
  %296 = vmatpush2.bf16.msra.mxu0 0
  %297 = vmatprep.mubr.bf16.mxu0 0
  %298 = vmatmul.mubr.bf16.gmra.mxu0 %v263
  %v299 = vpop.f32.mrf.mxu0
  %v300 = vadd.f32 %v245, %v299
  %v301 = vpop.f32.mrf.mxu0
  %v302 = vpop.f32.mrf.mxu0
  %v303 = vpop.f32.mrf.mxu0
  %304 = vdwg.mxu0
  %v305 = vld [vmem:[%s6] sm:$0x1]
  %v307 = vlaneseq
  %v308 = vshrl.u32 %v307, 7
  %v309 = vsub.s32 0, %v308
  %v310 = vrot.slane %v305, %v309
  %v312 = vadd.f32 %v300, %v310
  %v313 = vxor.u32 %v312, 2147483648
  %v314 = vmul.f32 %v313, 1.442695
  %v315 = vpow.pop %v314
  %v316 = vadd.f32 %v315, 1.0
  %v317 = vrcp.pop %v316
  %v318 = vmul.f32 1.0, %v317
  %v319 = vtanh.pop %v312
  %321 = vrot.lane.b32.xlu0 %v183, 32
  %v322 = vpop.permute.xlu0 %321
  %v324 = vmul.f32 %v318, %v322
  %326 = vrot.lane.b32.xlu0 %v319, 32
  %v327 = vpop.permute.xlu0 %326
  %v329 = vmul.f32 %v318, %v327
  %331 = vrot.lane.b32.xlu0 %v329, 32
  %v332 = vpop.permute.xlu0 %331
  %v334 = vadd.f32 %v324, %v332
  %v335 = vtanh.pop %v334
  %337 = vrot.lane.b32.xlu0 %v335, 32
  %v338 = vpop.permute.xlu0 %337
  %v340 = vmul.f32 %v318, %v338
  %342 = vrot.lane.b32.xlu0 %v340, 64
  %v343 = vpop.permute.xlu0 %342
  %345 = vst.msk [vmem:[%s13] sm:$0xff] %vm206, %v343
  %347 = vrot.lane.b32.xlu0 %v334, 96
  %v348 = vpop.permute.xlu0 %347
  %350 = vst.msk [vmem:[%s14] sm:$0xff] %vm206, %v348
  %s351 = scalar_lea.vmem %s13, 8
  %v352 = vld [vmem:[%s351] sm:$0xff]
  %s353 = scalar_lea.vmem %s14, 8
  %v354 = vld [vmem:[%s353] sm:$0xff]
  %v355 = vpack.c.bf16 %v340, %v340
  %v356 = vld [vmem:[%s7] sm:$0xf]
  %v357 = vld [vmem:[%s7 + $0x4] sm:$0xf]
  %v358 = vld [vmem:[%s7 + $0x8] sm:$0xf]
  %v359 = vld [vmem:[%s7 + $0xc] sm:$0xf]
  %v360 = vpack.c.bf16 %v352, %v352
  %v361 = vld [vmem:[%s8] sm:$0xf]
  %v362 = vld [vmem:[%s8 + $0x4] sm:$0xf]
  %v363 = vld [vmem:[%s8 + $0x8] sm:$0xf]
  %v364 = vld [vmem:[%s8 + $0xc] sm:$0xf]
  %v369 = vunpack.c.l.b16 %v361
  %v370 = vunpack.c.l.b16 %v362
  %v371 = vunpack.c.l.b16 %v363
  %v372 = vunpack.c.l.b16 %v364
  %v373 = vpack.c.b16 %v370, %v369
  %v374 = vpack.c.b16 %v372, %v371
  %v378 = vsel %vm206, %v360, 0
  %380 = vmatprep.subr.bf16.mxu0 0
  %381 = vmatpush1.bf16.msra.mxu0 0
  %382 = vmatprep.subr.bf16.mxu0 0
  %383 = vmatpush1.bf16.msra.mxu0 0
  %384 = vmatprep.subr.bf16.mxu0 0
  %385 = vmatpush1.bf16.msra.mxu0 0
  %386 = vmatprep.subr.bf16.mxu0 0
  %387 = vmatpush1.bf16.msra.mxu0 0
  %388 = vmatprep.subr.bf16.mxu0 0
  %389 = vmatpush1.bf16.msra.mxu0 0
  %390 = vmatprep.subr.bf16.mxu0 0
  %391 = vmatpush1.bf16.msra.mxu0 0
  %392 = vmatprep.subr.bf16.mxu0 0
  %393 = vmatpush1.bf16.msra.mxu0 %v374
  %394 = vmatprep.subr.bf16.mxu0 0
  %395 = vmatpush1.bf16.msra.mxu0 %v373
  %396 = vmatprep.subr.bf16.mxu0 0
  %397 = vmatpush2.bf16.msra.mxu0 0
  %398 = vmatprep.subr.bf16.mxu0 0
  %399 = vmatpush2.bf16.msra.mxu0 0
  %400 = vmatprep.subr.bf16.mxu0 0
  %401 = vmatpush2.bf16.msra.mxu0 0
  %402 = vmatprep.subr.bf16.mxu0 0
  %403 = vmatpush2.bf16.msra.mxu0 0
  %404 = vmatprep.subr.bf16.mxu0 0
  %405 = vmatpush2.bf16.msra.mxu0 0
  %406 = vmatprep.subr.bf16.mxu0 0
  %407 = vmatpush2.bf16.msra.mxu0 0
  %408 = vmatprep.subr.bf16.mxu0 0
  %409 = vmatpush2.bf16.msra.mxu0 0
  %410 = vmatprep.subr.bf16.mxu0 0
  %411 = vmatpush2.bf16.msra.mxu0 0
  %412 = vmatprep.mubr.bf16.mxu0 0
  %413 = vmatmul.mubr.bf16.gmra.mxu0 %v378
  %v414 = vpop.f32.mrf.mxu0
  %v415 = vadd.f32 0.0, %v414
  %v416 = vpop.f32.mrf.mxu0
  %v417 = vpop.f32.mrf.mxu0
  %v418 = vpop.f32.mrf.mxu0
  %419 = vdwg.mxu0
  %421 = vrot.lane.b32.xlu0 %v355, 64
  %v422 = vpop.permute.xlu0 %421
  %v427 = vunpack.c.l.b16 %v356
  %v428 = vunpack.c.l.b16 %v357
  %v429 = vunpack.c.l.b16 %v358
  %v430 = vunpack.c.l.b16 %v359
  %v431 = vpack.c.b16 %v428, %v427
  %v432 = vpack.c.b16 %v430, %v429
  %v436 = vsel %vm206, %v422, 0
  %438 = vmatprep.subr.bf16.mxu0 0
  %439 = vmatpush1.bf16.msra.mxu0 0
  %440 = vmatprep.subr.bf16.mxu0 0
  %441 = vmatpush1.bf16.msra.mxu0 0
  %442 = vmatprep.subr.bf16.mxu0 0
  %443 = vmatpush1.bf16.msra.mxu0 0
  %444 = vmatprep.subr.bf16.mxu0 0
  %445 = vmatpush1.bf16.msra.mxu0 0
  %446 = vmatprep.subr.bf16.mxu0 0
  %447 = vmatpush1.bf16.msra.mxu0 0
  %448 = vmatprep.subr.bf16.mxu0 0
  %449 = vmatpush1.bf16.msra.mxu0 0
  %450 = vmatprep.subr.bf16.mxu0 0
  %451 = vmatpush1.bf16.msra.mxu0 %v432
  %452 = vmatprep.subr.bf16.mxu0 0
  %453 = vmatpush1.bf16.msra.mxu0 %v431
  %454 = vmatprep.subr.bf16.mxu0 0
  %455 = vmatpush2.bf16.msra.mxu0 0
  %456 = vmatprep.subr.bf16.mxu0 0
  %457 = vmatpush2.bf16.msra.mxu0 0
  %458 = vmatprep.subr.bf16.mxu0 0
  %459 = vmatpush2.bf16.msra.mxu0 0
  %460 = vmatprep.subr.bf16.mxu0 0
  %461 = vmatpush2.bf16.msra.mxu0 0
  %462 = vmatprep.subr.bf16.mxu0 0
  %463 = vmatpush2.bf16.msra.mxu0 0
  %464 = vmatprep.subr.bf16.mxu0 0
  %465 = vmatpush2.bf16.msra.mxu0 0
  %466 = vmatprep.subr.bf16.mxu0 0
  %467 = vmatpush2.bf16.msra.mxu0 0
  %468 = vmatprep.subr.bf16.mxu0 0
  %469 = vmatpush2.bf16.msra.mxu0 0
  %470 = vmatprep.mubr.bf16.mxu0 0
  %471 = vmatmul.mubr.bf16.gmra.mxu0 %v436
  %v472 = vpop.f32.mrf.mxu0
  %v473 = vadd.f32 %v415, %v472
  %v474 = vpop.f32.mrf.mxu0
  %v475 = vpop.f32.mrf.mxu0
  %v476 = vpop.f32.mrf.mxu0
  %477 = vdwg.mxu0
  %v478 = vld [vmem:[%s9] sm:$0x1]
  %v480 = vlaneseq
  %v481 = vshrl.u32 %v480, 7
  %v482 = vsub.s32 0, %v481
  %v483 = vrot.slane %v478, %v482
  %v485 = vadd.f32 %v473, %v483
  %v486 = vxor.u32 %v485, 2147483648
  %v487 = vmul.f32 %v486, 1.442695
  %v488 = vpow.pop %v487
  %v489 = vadd.f32 %v488, 1.0
  %v490 = vrcp.pop %v489
  %v491 = vmul.f32 1.0, %v490
  %v492 = vtanh.pop %v485
  %494 = vrot.lane.b32.xlu0 %v354, 32
  %v495 = vpop.permute.xlu0 %494
  %v497 = vmul.f32 %v491, %v495
  %499 = vrot.lane.b32.xlu0 %v492, 32
  %v500 = vpop.permute.xlu0 %499
  %v502 = vmul.f32 %v491, %v500
  %504 = vrot.lane.b32.xlu0 %v502, 32
  %v505 = vpop.permute.xlu0 %504
  %v507 = vadd.f32 %v497, %v505
  %v508 = vtanh.pop %v507
  %510 = vrot.lane.b32.xlu0 %v508, 32
  %v511 = vpop.permute.xlu0 %510
  %v513 = vmul.f32 %v491, %v511
  %515 = vrot.lane.b32.xlu0 %v513, 64
  %v516 = vpop.permute.xlu0 %515
  %518 = vst.msk [vmem:[%s351] sm:$0xff] %vm206, %v516
  %520 = vrot.lane.b32.xlu0 %v507, 96
  %v521 = vpop.permute.xlu0 %520
  %523 = vst.msk [vmem:[%s353] sm:$0xff] %vm206, %v521
  %v524 = vpack.c.bf16 %v513, %v513
  %v525 = vld [vmem:[%s10] sm:$0xf]
  %v526 = vld [vmem:[%s10 + $0x4] sm:$0xf]
  %v527 = vld [vmem:[%s10 + $0x8] sm:$0xf]
  %v528 = vld [vmem:[%s10 + $0xc] sm:$0xf]
  %v529 = vld [vmem:[%s11] sm:$0x1]
  %v531 = vlaneseq
  %v532 = vshrl.u32 %v531, 7
  %v533 = vsub.s32 0, %v532
  %v534 = vrot.slane %v529, %v533
  %537 = vrot.lane.b32.xlu0 %v524, 64
  %v538 = vpop.permute.xlu0 %537
  %v543 = vunpack.c.l.b16 %v525
  %v544 = vunpack.c.l.b16 %v526
  %v545 = vunpack.c.l.b16 %v527
  %v546 = vunpack.c.l.b16 %v528
  %v547 = vpack.c.b16 %v544, %v543
  %v548 = vpack.c.b16 %v546, %v545
  %v552 = vsel %vm206, %v538, 0
  %554 = vmatprep.subr.bf16.mxu0 0
  %555 = vmatpush1.bf16.msra.mxu0 0
  %556 = vmatprep.subr.bf16.mxu0 0
  %557 = vmatpush1.bf16.msra.mxu0 0
  %558 = vmatprep.subr.bf16.mxu0 0
  %559 = vmatpush1.bf16.msra.mxu0 0
  %560 = vmatprep.subr.bf16.mxu0 0
  %561 = vmatpush1.bf16.msra.mxu0 0
  %562 = vmatprep.subr.bf16.mxu0 0
  %563 = vmatpush1.bf16.msra.mxu0 0
  %564 = vmatprep.subr.bf16.mxu0 0
  %565 = vmatpush1.bf16.msra.mxu0 0
  %566 = vmatprep.subr.bf16.mxu0 0
  %567 = vmatpush1.bf16.msra.mxu0 %v548
  %568 = vmatprep.subr.bf16.mxu0 0
  %569 = vmatpush1.bf16.msra.mxu0 %v547
  %570 = vmatprep.subr.bf16.mxu0 0
  %571 = vmatpush2.bf16.msra.mxu0 0
  %572 = vmatprep.subr.bf16.mxu0 0
  %573 = vmatpush2.bf16.msra.mxu0 0
  %574 = vmatprep.subr.bf16.mxu0 0
  %575 = vmatpush2.bf16.msra.mxu0 0
  %576 = vmatprep.subr.bf16.mxu0 0
  %577 = vmatpush2.bf16.msra.mxu0 0
  %578 = vmatprep.subr.bf16.mxu0 0
  %579 = vmatpush2.bf16.msra.mxu0 0
  %580 = vmatprep.subr.bf16.mxu0 0
  %581 = vmatpush2.bf16.msra.mxu0 0
  %582 = vmatprep.subr.bf16.mxu0 0
  %583 = vmatpush2.bf16.msra.mxu0 0
  %584 = vmatprep.subr.bf16.mxu0 0
  %585 = vmatpush2.bf16.msra.mxu0 0
  %586 = vmatprep.mubr.bf16.mxu0 0
  %587 = vmatmul.mubr.bf16.gmra.mxu0 %v552
  %v588 = vpop.f32.mrf.mxu0
  %v589 = vadd.f32 %v534, %v588
  %v590 = vpop.f32.mrf.mxu0
  %v591 = vpop.f32.mrf.mxu0
  %v592 = vpop.f32.mrf.mxu0
  %593 = vdwg.mxu0
  %594 = vst [vmem:[%s12] sm:$0xff] %v589
  // Predicated region
  $region50: #{one_step_decoder.1} parent=0 // pred_check
    _
  $region51: #{one_step_decoder.1} parent=0 // pred_check_branch
    %596 = sbr.rel (0) target = $region53
  $region52: #{one_step_decoder.1} parent=0 // pred_region
    _
  $region53: #{one_step_decoder.1} parent=0 // pred_fallthru
    _
  // Predicated region
  $region54: #{one_step_decoder.1} parent=0 // pred_check
    _
  $region55: #{one_step_decoder.1} parent=0 // pred_check_branch
    %598 = sbr.rel (0) target = $region57
  $region56: #{one_step_decoder.1} parent=0 // pred_region
    _
  $region57: #{one_step_decoder.1} parent=0 // pred_fallthru
    _
  // Predicated region
  $region58: #{one_step_decoder.1} parent=0 // pred_check
    _
  $region59: #{one_step_decoder.1} parent=0 // pred_check_branch
    %600 = sbr.rel (0) target = $region61
  $region60: #{one_step_decoder.1} parent=0 // pred_region
    _
  $region61: #{one_step_decoder.1} parent=0 // pred_fallthru
    _
  // Predicated region
  $region62: #{one_step_decoder.1} parent=0 // pred_check
    _
  $region63: #{one_step_decoder.1} parent=0 // pred_check_branch
    %602 = sbr.rel (0) target = $region65
  $region64: #{one_step_decoder.1} parent=0 // pred_region
    _
  $region65: #{one_step_decoder.1} parent=0 // pred_fallthru
    _
  // Predicated region
  $region66: #{one_step_decoder.1} parent=0 // pred_check
    _
  $region67: #{one_step_decoder.1} parent=0 // pred_check_branch
    %604 = sbr.rel (0) target = $region69
  $region68: #{one_step_decoder.1} parent=0 // pred_region
    _
  $region69: #{one_step_decoder.1} parent=0 // pred_fallthru
    _
  // Predicated region
  $region70: #{one_step_decoder.1} parent=0 // pred_check
    _
  $region71: #{one_step_decoder.1} parent=0 // pred_check_branch
    %606 = sbr.rel (0) target = $region73
  $region72: #{one_step_decoder.1} parent=0 // pred_region
    _
  $region73: #{one_step_decoder.1} parent=0 // pred_fallthru
    _

</llo_original>
